<compile_context>
chip_gen: v7x
topology: tpu7x:2x2x1
jax: 0.10.0
libtpu: 0.0.40
codegen_flags: <defaults>
</compile_context>

<pallas_src>
import functools

import jax
import jax.numpy as jnp
import numpy as np
from jax import lax
from jax.experimental import pallas as pl
from jax.experimental.pallas import tpu as pltpu


def adj_reverse_kernel(var_ref, gvar_ref, w_ref, b_ref,
                       var_dot_ref, gvar_dot_ref):
    """One batch tile of aug_reverse for linear dynamics f(t, x) = x @ W^T + b."""
    var = var_ref[...]        # (TB, D)  f32 or bf16
    gvar = gvar_ref[...]      # (TB, D)  f32 or bf16
    W = w_ref[...]            # (D, D)   (out, in) layout like torch.nn.Linear
    b = b_ref[...]            # (1, D)   f32

    # var_dot = var @ W^T + b : contract dim 1 of var with dim 1 of W directly
    # (no materialized transpose before the MXU push).
    var_dot = lax.dot_general(
        var, W,
        dimension_numbers=(((1,), (1,)), ((), ())),
        preferred_element_type=jnp.float32,
    ) + b
    var_dot_ref[...] = var_dot.astype(var_dot_ref.dtype)

    # grad_var_dot = grad(-hamilton, var) = -(grad_var @ W)
    gvar_dot = lax.dot_general(
        gvar, W,
        dimension_numbers=(((1,), (0,)), ((), ())),
        preferred_element_type=jnp.float32,
    )
    gvar_dot_ref[...] = (-gvar_dot).astype(gvar_dot_ref.dtype)


@functools.partial(jax.jit, static_argnames=("tb",))
def aug_reverse_pallas(var, grad_var, grad_logj, W, b, *, tb=128):
    """Returns (var_dot, grad_var_dot, tie_adjoints, hamilton)."""
    B, D = var.shape
    assert B % tb == 0

    var_dot, grad_var_dot = pl.pallas_call(
        adj_reverse_kernel,
        out_shape=(jax.ShapeDtypeStruct((B, D), jnp.float32),
                   jax.ShapeDtypeStruct((B, D), jnp.float32)),
        grid=(B // tb,),
        in_specs=[
            pl.BlockSpec((tb, D), lambda i: (i, 0)),   # var    (tiled on batch)
            pl.BlockSpec((tb, D), lambda i: (i, 0)),   # grad_var
            pl.BlockSpec((D, D), lambda i: (0, 0)),    # W : VMEM-resident
            pl.BlockSpec((1, D), lambda i: (0, 0)),    # b : VMEM-resident
        ],
        out_specs=(
            pl.BlockSpec((tb, D), lambda i: (i, 0)),   # var_dot
            pl.BlockSpec((tb, D), lambda i: (i, 0)),   # grad_var_dot
        ),
        compiler_params=pltpu.CompilerParams(
            # batch tiles are independent -> shard across TCs (v7x megacore)
            dimension_semantics=("parallel",),
        ),
    )(var, grad_var, W, b)

    # Loop-invariant / lane-sparse follow-ups, fused by XLA outside the kernel.
    W_f32 = W.astype(jnp.float32)
    trace_w = jnp.trace(W_f32)                                   # exact logj_dot
    tie = jnp.sum(grad_var.astype(jnp.float32) * var_dot,
                  axis=-1, keepdims=True)                        # (B, 1)
    ham = jnp.sum(grad_logj * trace_w + tie, axis=0, keepdims=True)  # (1, 1)
    return var_dot, grad_var_dot, tie, ham


def aug_reverse_reference(var, grad_var, grad_logj, W, b):
    P = lax.Precision.HIGHEST
    var_dot = jnp.dot(var, W.T, precision=P) + b
    grad_var_dot = -jnp.dot(grad_var, W, precision=P)
    tie = jnp.sum(grad_var * var_dot, axis=-1, keepdims=True)
    ham = jnp.sum(grad_logj * jnp.trace(W) + tie, axis=0, keepdims=True)
    return var_dot, grad_var_dot, tie, ham


if __name__ == "__main__":
    # Lane-dense sizing: D is a multiple of 128; batch tiles of 128 rows fill
    # the MXU LHS. Two tiles -> a 2-wide "parallel" grid (exercises both v7x TCs).
    B, D = 256, 128

    key = jax.random.PRNGKey(0)
    k1, k2, k3, k4, k5 = jax.random.split(key, 5)

    var = jax.random.normal(k1, (B, D), jnp.float32)        # state
    grad_var = jax.random.normal(k2, (B, D), jnp.float32)   # adjoint state
    grad_logj = jax.random.normal(k3, (B, 1), jnp.float32)  # dL/dlogj
    W = 0.1 * jax.random.normal(k4, (D, D), jnp.float32)    # linear dynamics
    b = 0.1 * jax.random.normal(k5, (1, D), jnp.float32)

    # float32 path: assert against the reference.
    outs = aug_reverse_pallas(var, grad_var, grad_logj, W, b)
    outs = jax.block_until_ready(outs)
    refs = aug_reverse_reference(var, grad_var, grad_logj, W, b)
    for o, r in zip(outs, refs):
        np.testing.assert_allclose(np.asarray(o), np.asarray(r),
                                   rtol=1e-4, atol=1e-3)

    # bf16 MXU-operand path (v6e/v7x): operands bf16, f32 accumulation, f32
    # elementwise (v5e-safe). Smoke-test that it compiles, runs, and is finite.
    outs_bf16 = aug_reverse_pallas(var.astype(jnp.bfloat16),
                                   grad_var.astype(jnp.bfloat16),
                                   grad_logj,
                                   W.astype(jnp.bfloat16),
                                   b)
    outs_bf16 = jax.block_until_ready(outs_bf16)
    assert all(bool(jnp.all(jnp.isfinite(o))) for o in outs_bf16)

    print("KERNEL_OK")
</pallas_src>

<mosaic_0001>
module attributes {stable_mosaic.version = 11 : i64} {
  func.func @adj_reverse_kernel(%arg0: i32, %arg1: memref<128x128xf32, #tpu.memory_space<vmem>>, %arg2: memref<128x128xf32, #tpu.memory_space<vmem>>, %arg3: memref<128x128xf32, #tpu.memory_space<vmem>>, %arg4: memref<1x128xf32, #tpu.memory_space<vmem>>, %arg5: memref<128x128xf32, #tpu.memory_space<vmem>>, %arg6: memref<128x128xf32, #tpu.memory_space<vmem>>) attributes {dimension_semantics = [#tpu.dimension_semantics<parallel>], iteration_bounds = array<i64: 2>, scalar_prefetch = 0 : i64, scratch_operands = 0 : i64, tpu.core_type = #tpu.core_type<tc>, window_params = [{transform_indices = @transform_0, window_bounds = array<i64: 128, 128>}, {transform_indices = @transform_1, window_bounds = array<i64: 128, 128>}, {pipeline_mode = #tpu.pipeline_mode<synchronous>, transform_indices = @transform_2, window_bounds = array<i64: 128, 128>}, {pipeline_mode = #tpu.pipeline_mode<synchronous>, transform_indices = @transform_3, window_bounds = array<i64: 1, 128>}, {transform_indices = @transform_4, window_bounds = array<i64: 128, 128>}, {transform_indices = @transform_5, window_bounds = array<i64: 128, 128>}]} {
    %c0 = arith.constant 0 : index
    %c0_0 = arith.constant 0 : index
    %0 = vector.load %arg1[%c0, %c0_0] : memref<128x128xf32, #tpu.memory_space<vmem>>, vector<128x128xf32>
    %c0_1 = arith.constant 0 : index
    %c0_2 = arith.constant 0 : index
    %1 = vector.load %arg2[%c0_1, %c0_2] : memref<128x128xf32, #tpu.memory_space<vmem>>, vector<128x128xf32>
    %c0_3 = arith.constant 0 : index
    %c0_4 = arith.constant 0 : index
    %2 = vector.load %arg3[%c0_3, %c0_4] : memref<128x128xf32, #tpu.memory_space<vmem>>, vector<128x128xf32>
    %c0_5 = arith.constant 0 : index
    %c0_6 = arith.constant 0 : index
    %3 = vector.load %arg4[%c0_5, %c0_6] : memref<1x128xf32, #tpu.memory_space<vmem>>, vector<1x128xf32>
    %cst = arith.constant dense<0.000000e+00> : vector<128x128xf32>
    %4 = tpu.matmul %0, %2, %cst {dimension_numbers = #tpu.dot_dimension_numbers<[1], [1], [0], [0], [0, 0, 1, 0], [], []>} : vector<128x128xf32>, vector<128x128xf32>, vector<128x128xf32> -> vector<128x128xf32>
    %5 = vector.broadcast %3 : vector<1x128xf32> to vector<128x128xf32>
    %6 = arith.addf %4, %5 : vector<128x128xf32>
    %c0_7 = arith.constant 0 : index
    %c0_8 = arith.constant 0 : index
    %7 = vector.load %arg5[%c0_7, %c0_8] : memref<128x128xf32, #tpu.memory_space<vmem>>, vector<128x128xf32>
    tpu.vector_store %arg5[%c0_7, %c0_8], %6 {strides = array<i32>} : memref<128x128xf32, #tpu.memory_space<vmem>>, vector<128x128xf32>,
    %cst_9 = arith.constant dense<0.000000e+00> : vector<128x128xf32>
    %8 = tpu.matmul %1, %2, %cst_9 {dimension_numbers = #tpu.dot_dimension_numbers<[1], [0], [0], [1], [0, 0, 1, 1], [], []>} : vector<128x128xf32>, vector<128x128xf32>, vector<128x128xf32> -> vector<128x128xf32>
    %cst_10 = arith.constant 0.000000e+00 : f32
    %9 = vector.broadcast %cst_10 : f32 to vector<128x128xf32>
    %10 = arith.subf %9, %8 : vector<128x128xf32>
    %c0_11 = arith.constant 0 : index
    %c0_12 = arith.constant 0 : index
    %11 = vector.load %arg6[%c0_11, %c0_12] : memref<128x128xf32, #tpu.memory_space<vmem>>, vector<128x128xf32>
    tpu.vector_store %arg6[%c0_11, %c0_12], %10 {strides = array<i32>} : memref<128x128xf32, #tpu.memory_space<vmem>>, vector<128x128xf32>,
    return
  }
  func.func @transform_0(%arg0: i32) -> (i32, i32) {
    %c0_i32 = arith.constant 0 : i32
    %c0_i32_0 = arith.constant 0 : i32
    return %arg0, %c0_i32 : i32, i32
  }
  func.func @transform_1(%arg0: i32) -> (i32, i32) {
    %c0_i32 = arith.constant 0 : i32
    %c0_i32_0 = arith.constant 0 : i32
    return %arg0, %c0_i32 : i32, i32
  }
  func.func @transform_2(%arg0: i32) -> (i32, i32) {
    %c0_i32 = arith.constant 0 : i32
    %c0_i32_0 = arith.constant 0 : i32
    %c0_i32_1 = arith.constant 0 : i32
    return %c0_i32, %c0_i32_0 : i32, i32
  }
  func.func @transform_3(%arg0: i32) -> (i32, i32) {
    %c0_i32 = arith.constant 0 : i32
    %c0_i32_0 = arith.constant 0 : i32
    %c0_i32_1 = arith.constant 0 : i32
    return %c0_i32, %c0_i32_0 : i32, i32
  }
  func.func @transform_4(%arg0: i32) -> (i32, i32) {
    %c0_i32 = arith.constant 0 : i32
    %c0_i32_0 = arith.constant 0 : i32
    return %arg0, %c0_i32 : i32, i32
  }
  func.func @transform_5(%arg0: i32) -> (i32, i32) {
    %c0_i32 = arith.constant 0 : i32
    %c0_i32_0 = arith.constant 0 : i32
    return %arg0, %c0_i32 : i32, i32
  }
}

</mosaic_0001>

<llo_original>
// kernel: aug_reverse_pallas.1
$region0: #{aug_reverse_pallas.1}
  #allocation0 [shape = 'u32[]', space=smem, size = 0x4, offset = 0x4, fixed_abs, tag = 'smem constant byte address 0x4 - core index']
  #allocation1 [shape = 'u32[144,128]{1,0:T(1,128)}', space=vmem, size = 0x12000, scoped, tag = 'internal scratch']
  %s0 = inlined_call_operand.hbm [shape: f32[256,128], index: 0, kind: input, shape index: {}]
  %s1 = inlined_call_operand.hbm [shape: f32[256,128], index: 1, kind: input, shape index: {}]
  %s2 = inlined_call_operand.vmem [shape: f32[128,128], index: 2, kind: input, shape index: {}]
  %s3 = inlined_call_operand.vmem [shape: f32[1,128], index: 3, kind: input, shape index: {}]
  %s4 = inlined_call_operand.vmem [shape: f32[256,128], index: 4, kind: output, shape index: {0}]
  %s5 = inlined_call_operand.hbm [shape: f32[256,128], index: 5, kind: output, shape index: {1}]
  %6 = xla_tuple %s4, %s5
  %s7 = sld [smem:[#allocation0]]
  $region65: #{aug_reverse_pallas.1} parent=0
    _
  %s9 = ssub.s32 1, %s7
  %s10 = scalar_select 0, %s9, %s7
  $region1: #{aug_reverse_pallas.1} parent=0
    #allocation2 [shape = 'u8[131072]{0}', space=vmem, size = 0x20000, scoped, tag = 'input window, operand 0']
    #allocation3 [shape = 's32[2]{0}', space=sflag, size = 0x8, scoped, tag = 'scoped memory for aug_reverse_pallas.1']
    #allocation4 [shape = 's32[2]{0}', space=sflag, size = 0x8, scoped, tag = 'scoped memory for aug_reverse_pallas.1']
    #allocation5 [shape = 'u8[131072]{0}', space=vmem, size = 0x20000, scoped, tag = 'input window, operand 1']
    #allocation6 [shape = 's32[2]{0}', space=sflag, size = 0x8, scoped, tag = 'scoped memory for aug_reverse_pallas.1']
    #allocation7 [shape = 'u8[131072]{0}', space=vmem, size = 0x20000, scoped, tag = 'output window, operand 1']
    %11 = vsyncpa [#allocation3], 0
    %s12 = scalar_lea.sflag [#allocation3], 1
    %13 = vsyncpa %s12, 0
    %14 = vsyncpa [#allocation6], 0
    %s15 = scalar_lea.sflag [#allocation6], 1
    %16 = vsyncpa %s15, 0
    %17 = vsyncpa [#allocation4], 0
    %s18 = scalar_lea.sflag [#allocation4], 1
    %19 = vsyncpa %s18, 0
    loop: start=0, step=1, limit=4
    $region2: #{aug_reverse_pallas.1} parent=1 // loop_pre_header
      _
    $region3: #{aug_reverse_pallas.1} parent=1 // loop_header
      %s21 = sphi 0, %s25
      %p22 = scmp.ge.s32.totalorder %s21, 4
      %s31 = sphi 0, %s33
      %s34 = sphi 0, %s31
      %s35 = sphi 0, %s34
      %s51 = sphi 0, %s35
      %s57 = sphi 0, %s59
      %s60 = sphi 0, %s57
      %s61 = sphi 0, %s60
      %s77 = sphi 0, %s61
      %s81 = sphi 0, %s81
      %s83 = sphi 0, %s81
      %s84 = sphi 0, %s83
      %s98 = sphi 0, %s84
      %s102 = sphi 0, %s102
      %s104 = sphi 0, %s102
      %s105 = sphi 0, %s104
      %s119 = sphi 0, %s105
      %s125 = sphi 0, %s127
      %s128 = sphi 0, %s125
      %s129 = sphi 0, %s128
      %s145 = sphi 0, %s129
      %s151 = sphi 0, %s153
      %s154 = sphi 0, %s151
      %s155 = sphi 0, %s154
      %s171 = sphi 0, %s155
    $region4: #{aug_reverse_pallas.1} parent=1 // loop_header_branch
      %24 = sbr.rel (%p22) target = $region8
    $region5: #{aug_reverse_pallas.1} parent=1 // loop_body
      %s26 = ssub.s32 %s21, 1
      %s27 = ssub.s32 %s21, 2
      %s28 = sadd.s32 %s21, 1
      %s29 = ssub.s32 %s21, %s28
      %p30 = scmp.eq.s32.totalorder %s29, 0
      %s32 = sadd.s32 %s31, 1
      %s33 = scalar_select %p30, %s31, %s32
      %p36 = pneg %p30
      %p37 = scmp.eq.s32.totalorder %s21, 1
      %p38 = por %p36, %p37
      %p39 = scmp.ne.s32.totalorder %s31, %s34
      %p40 = scmp.eq.s32.totalorder %s21, 0
      %p41 = por %p39, %p40
      %p42 = scmp.ne.s32.totalorder %s31, %s34
      %p43 = scmp.eq.s32.totalorder %s26, 1
      %p44 = por %p42, %p43
      %p45 = scmp.ne.s32.totalorder %s34, %s35
      %p46 = scmp.eq.s32.totalorder %s26, 0
      %p47 = por %p45, %p46
      %p48 = scmp.ne.s32.totalorder %s34, %s35
      %p49 = scmp.eq.s32.totalorder %s27, 1
      %p50 = por %p48, %p49
      %p52 = scmp.ne.s32.totalorder %s35, %s51
      %p53 = scmp.eq.s32.totalorder %s27, 0
      %p54 = por %p52, %p53
      %s55 = ssub.s32 %s21, %s28
      %p56 = scmp.eq.s32.totalorder %s55, 0
      %s58 = sadd.s32 %s57, 1
      %s59 = scalar_select %p56, %s57, %s58
      %p62 = pneg %p56
      %p63 = scmp.eq.s32.totalorder %s21, 1
      %p64 = por %p62, %p63
      %p65 = scmp.ne.s32.totalorder %s57, %s60
      %p66 = scmp.eq.s32.totalorder %s21, 0
      %p67 = por %p65, %p66
      %p68 = scmp.ne.s32.totalorder %s57, %s60
      %p69 = scmp.eq.s32.totalorder %s26, 1
      %p70 = por %p68, %p69
      %p71 = scmp.ne.s32.totalorder %s60, %s61
      %p72 = scmp.eq.s32.totalorder %s26, 0
      %p73 = por %p71, %p72
      %p74 = scmp.ne.s32.totalorder %s60, %s61
      %p75 = scmp.eq.s32.totalorder %s27, 1
      %p76 = por %p74, %p75
      %p78 = scmp.ne.s32.totalorder %s61, %s77
      %p79 = scmp.eq.s32.totalorder %s27, 0
      %p80 = por %p78, %p79
      %s82 = sadd.s32 %s81, 1
      %p85 = scmp.eq.s32.totalorder %s21, 1
      %p86 = scmp.ne.s32.totalorder %s81, %s83
      %p87 = scmp.eq.s32.totalorder %s21, 0
      %p88 = por %p86, %p87
      %p89 = scmp.ne.s32.totalorder %s81, %s83
      %p90 = scmp.eq.s32.totalorder %s26, 1
      %p91 = por %p89, %p90
      %p92 = scmp.ne.s32.totalorder %s83, %s84
      %p93 = scmp.eq.s32.totalorder %s26, 0
      %p94 = por %p92, %p93
      %p95 = scmp.ne.s32.totalorder %s83, %s84
      %p96 = scmp.eq.s32.totalorder %s27, 1
      %p97 = por %p95, %p96
      %p99 = scmp.ne.s32.totalorder %s84, %s98
      %p100 = scmp.eq.s32.totalorder %s27, 0
      %p101 = por %p99, %p100
      %s103 = sadd.s32 %s102, 1
      %p106 = scmp.eq.s32.totalorder %s21, 1
      %p107 = scmp.ne.s32.totalorder %s102, %s104
      %p108 = scmp.eq.s32.totalorder %s21, 0
      %p109 = por %p107, %p108
      %p110 = scmp.ne.s32.totalorder %s102, %s104
      %p111 = scmp.eq.s32.totalorder %s26, 1
      %p112 = por %p110, %p111
      %p113 = scmp.ne.s32.totalorder %s104, %s105
      %p114 = scmp.eq.s32.totalorder %s26, 0
      %p115 = por %p113, %p114
      %p116 = scmp.ne.s32.totalorder %s104, %s105
      %p117 = scmp.eq.s32.totalorder %s27, 1
      %p118 = por %p116, %p117
      %p120 = scmp.ne.s32.totalorder %s105, %s119
      %p121 = scmp.eq.s32.totalorder %s27, 0
      %p122 = por %p120, %p121
      %s123 = ssub.s32 %s21, %s28
      %p124 = scmp.eq.s32.totalorder %s123, 0
      %s126 = sadd.s32 %s125, 1
      %s127 = scalar_select %p124, %s125, %s126
      %p130 = pneg %p124
      %p131 = scmp.eq.s32.totalorder %s21, 1
      %p132 = por %p130, %p131
      %p133 = scmp.ne.s32.totalorder %s125, %s128
      %p134 = scmp.eq.s32.totalorder %s21, 0
      %p135 = por %p133, %p134
      %p136 = scmp.ne.s32.totalorder %s125, %s128
      %p137 = scmp.eq.s32.totalorder %s26, 1
      %p138 = por %p136, %p137
      %p139 = scmp.ne.s32.totalorder %s128, %s129
      %p140 = scmp.eq.s32.totalorder %s26, 0
      %p141 = por %p139, %p140
      %p142 = scmp.ne.s32.totalorder %s128, %s129
      %p143 = scmp.eq.s32.totalorder %s27, 1
      %p144 = por %p142, %p143
      %p146 = scmp.ne.s32.totalorder %s129, %s145
      %p147 = scmp.eq.s32.totalorder %s27, 0
      %p148 = por %p146, %p147
      %s149 = ssub.s32 %s21, %s28
      %p150 = scmp.eq.s32.totalorder %s149, 0
      %s152 = sadd.s32 %s151, 1
      %s153 = scalar_select %p150, %s151, %s152
      %p156 = pneg %p150
      %p157 = scmp.eq.s32.totalorder %s21, 1
      %p158 = por %p156, %p157
      %p159 = scmp.ne.s32.totalorder %s151, %s154
      %p160 = scmp.eq.s32.totalorder %s21, 0
      %p161 = por %p159, %p160
      %p162 = scmp.ne.s32.totalorder %s151, %s154
      %p163 = scmp.eq.s32.totalorder %s26, 1
      %p164 = por %p162, %p163
      %p165 = scmp.ne.s32.totalorder %s154, %s155
      %p166 = scmp.eq.s32.totalorder %s26, 0
      %p167 = por %p165, %p166
      %p168 = scmp.ne.s32.totalorder %s154, %s155
      %p169 = scmp.eq.s32.totalorder %s27, 1
      %p170 = por %p168, %p169
      %p172 = scmp.ne.s32.totalorder %s155, %s171
      %p173 = scmp.eq.s32.totalorder %s27, 0
      %p174 = por %p172, %p173
      %p175 = scmp.le.s32.totalorder 1, %s21
      %p176 = scmp.lt.s32.totalorder %s21, 3
      %p177 = pnand %p175, %p176
      %p178 = pneg %p177
      // Predicated region
      $region9: #{aug_reverse_pallas.1} parent=5 // pred_check
        _
      $region10: #{aug_reverse_pallas.1} parent=5 // pred_check_branch
        %180 = sbr.rel (%p177) target = $region12
      $region11: #{aug_reverse_pallas.1} parent=5 // pred_region
        %s181 = ssub.s32 %s21, 1
        // Predicated region
        $region13: #{aug_reverse_pallas.1} parent=11 // pred_check
          %p182 = pneg %p94
        $region14: #{aug_reverse_pallas.1} parent=11 // pred_check_branch
          %184 = sbr.rel (%p182) target = $region16
        $region15: #{aug_reverse_pallas.1} parent=11 // pred_region
          _
        $region16: #{aug_reverse_pallas.1} parent=11 // pred_fallthru
          _
        // Predicated region
        $region17: #{aug_reverse_pallas.1} parent=11 // pred_check
          %p185 = pneg %p115
        $region18: #{aug_reverse_pallas.1} parent=11 // pred_check_branch
          %187 = sbr.rel (%p185) target = $region20
        $region19: #{aug_reverse_pallas.1} parent=11 // pred_region
          _
        $region20: #{aug_reverse_pallas.1} parent=11 // pred_fallthru
          _
      $region12: #{aug_reverse_pallas.1} parent=5 // pred_fallthru
        _
      %p188 = scmp.lt.s32.totalorder %s21, 2
      // Predicated region
      $region21: #{aug_reverse_pallas.1} parent=5 // pred_check
        %p189 = pneg %p188
      $region22: #{aug_reverse_pallas.1} parent=5 // pred_check_branch
        %191 = sbr.rel (%p189) target = $region24
      $region23: #{aug_reverse_pallas.1} parent=5 // pred_region
        // Predicated region
        $region25: #{aug_reverse_pallas.1} parent=23 // pred_check
          %p192 = pneg %p41
        $region26: #{aug_reverse_pallas.1} parent=23 // pred_check_branch
          %194 = sbr.rel (%p192) target = $region28
        $region27: #{aug_reverse_pallas.1} parent=23 // pred_region
          %s195 = sand.u32 %s31, 1
          %s196 = scalar_lea.sflag [#allocation3], %s195
          %s197 = sand.u32 %s31, 1
          %s198 = smul.addr %s197, 128
          %s199 = scalar_lea.vmem [#allocation2], %s198
          %s200 = smul.u32 16, %s21
          %s202 = ssub.s32 2048, 2048
          %203 = vsyncadd %s196, %s202
          %s204 = smul.addr %s200, 128
          %s205 = scalar_lea.hbm %s0, %s204
          %s206 = sshll.u32 %s199, 4
          %s207 = int_to_ptr.vmem [resolvable:$true] %s206
          %212 = dma.hbm_to_vmem [thread:$0]  %s205, 2048, %s207, %s196, 128, 128, 8
        $region28: #{aug_reverse_pallas.1} parent=23 // pred_fallthru
          _
        // Predicated region
        $region29: #{aug_reverse_pallas.1} parent=23 // pred_check
          %p213 = pneg %p67
        $region30: #{aug_reverse_pallas.1} parent=23 // pred_check_branch
          %215 = sbr.rel (%p213) target = $region32
        $region31: #{aug_reverse_pallas.1} parent=23 // pred_region
          %s216 = sand.u32 %s57, 1
          %s217 = scalar_lea.sflag [#allocation6], %s216
          %s218 = sand.u32 %s57, 1
          %s219 = smul.addr %s218, 128
          %s220 = scalar_lea.vmem [#allocation5], %s219
          %s221 = smul.u32 16, %s21
          %s223 = ssub.s32 2048, 2048
          %224 = vsyncadd %s217, %s223
          %s225 = smul.addr %s221, 128
          %s226 = scalar_lea.hbm %s1, %s225
          %s227 = sshll.u32 %s220, 4
          %s228 = int_to_ptr.vmem [resolvable:$true] %s227
          %233 = dma.hbm_to_vmem [thread:$0]  %s226, 2048, %s228, %s217, 128, 128, 8
        $region32: #{aug_reverse_pallas.1} parent=23 // pred_fallthru
          _
      $region24: #{aug_reverse_pallas.1} parent=5 // pred_fallthru
        _
      %p234 = scmp.le.s32.totalorder 1, %s21
      %p235 = scmp.lt.s32.totalorder %s21, 3
      %p236 = pnand %p234, %p235
      %p237 = pneg %p236
      // Predicated region
      $region33: #{aug_reverse_pallas.1} parent=5 // pred_check
        _
      $region34: #{aug_reverse_pallas.1} parent=5 // pred_check_branch
        %239 = sbr.rel (%p236) target = $region36
      $region35: #{aug_reverse_pallas.1} parent=5 // pred_region
        %s240 = ssub.s32 %s21, 1
        %s241 = sand.u32 %s34, 1
        %s242 = scalar_lea.sflag [#allocation3], %s241
        %s243 = sand.u32 %s34, 1
        %s244 = smul.addr %s243, 128
        %s245 = scalar_lea.vmem [#allocation2], %s244
        // Predicated region
        $region37: #{aug_reverse_pallas.1} parent=35 // pred_check
          %p246 = pneg %p47
        $region38: #{aug_reverse_pallas.1} parent=35 // pred_check_branch
          %248 = sbr.rel (%p246) target = $region40
        $region39: #{aug_reverse_pallas.1} parent=35 // pred_region
          %249 = dma.done %s242, 2048
        $region40: #{aug_reverse_pallas.1} parent=35 // pred_fallthru
          _
        %s250 = sand.u32 %s60, 1
        %s251 = scalar_lea.sflag [#allocation6], %s250
        %s252 = sand.u32 %s60, 1
        %s253 = smul.addr %s252, 128
        %s254 = scalar_lea.vmem [#allocation5], %s253
        // Predicated region
        $region41: #{aug_reverse_pallas.1} parent=35 // pred_check
          %p255 = pneg %p73
        $region42: #{aug_reverse_pallas.1} parent=35 // pred_check_branch
          %257 = sbr.rel (%p255) target = $region44
        $region43: #{aug_reverse_pallas.1} parent=35 // pred_region
          %258 = dma.done %s251, 2048
        $region44: #{aug_reverse_pallas.1} parent=35 // pred_fallthru
          _
        %s259 = sand.u32 %s34, 1
        %s260 = scalar_lea.sflag [#allocation3], %s259
        %s261 = sand.u32 %s34, 1
        %s262 = smul.addr %s261, 128
        %s263 = scalar_lea.vmem [#allocation2], %s262
        %p264 = pneg %p47
        %p265 = pneg %p44
        %s266 = sand.u32 %s60, 1
        %s267 = scalar_lea.sflag [#allocation6], %s266
        %s268 = sand.u32 %s60, 1
        %s269 = smul.addr %s268, 128
        %s270 = scalar_lea.vmem [#allocation5], %s269
        %p271 = pneg %p73
        %p272 = pneg %p70
        %p273 = pneg %p94
        %p274 = pneg %p91
        %p275 = pneg %p115
        %p276 = pneg %p112
        %p277 = pneg %p141
        %p278 = pneg %p138
        %s279 = smul.u32 16, %s26
        %p280 = scmp.lt.s32.totalorder %s279, 31
        %s281 = scalar_select %p280, %s279, 31
        %s282 = smul.addr %s281, 8
        %s283 = scalar_lea.vmem %s4, %s282
        %p284 = pneg %p167
        %p285 = pneg %p164
        %s286 = sand.u32 %s154, 1
        %s287 = scalar_lea.sflag [#allocation4], %s286
        %s288 = sand.u32 %s154, 1
        %s289 = smul.addr %s288, 128
        %s290 = scalar_lea.vmem [#allocation7], %s289
        %s291 = smul.u32 16, %s26
        %s292 = smul.u32 16, %s26
        %s293 = smul.u32 16, %s26
        %p294 = scmp.lt.s32.totalorder %s293, 31
        %s295 = scalar_select %p294, %s293, 31
        %s296 = smul.addr %s295, 8
        %s297 = scalar_lea.vmem %s4, %s296
        %s298 = smul.u32 16, %s26
        %s299 = smul.u32 16, %s26
        %v300 = vld [vmem:[%s245] sm:$0xff]
        %v301 = vld [vmem:[%s245 + $0x8] sm:$0xff]
        %v302 = vld [vmem:[%s245 + $0x10] sm:$0xff]
        %v303 = vld [vmem:[%s245 + $0x18] sm:$0xff]
        %v304 = vld [vmem:[%s245 + $0x20] sm:$0xff]
        %v305 = vld [vmem:[%s245 + $0x28] sm:$0xff]
        %v306 = vld [vmem:[%s245 + $0x30] sm:$0xff]
        %v307 = vld [vmem:[%s245 + $0x38] sm:$0xff]
        %v308 = vld [vmem:[%s245 + $0x40] sm:$0xff]
        %v309 = vld [vmem:[%s245 + $0x48] sm:$0xff]
        %v310 = vld [vmem:[%s245 + $0x50] sm:$0xff]
        %v311 = vld [vmem:[%s245 + $0x58] sm:$0xff]
        %v312 = vld [vmem:[%s245 + $0x60] sm:$0xff]
        %v313 = vld [vmem:[%s245 + $0x68] sm:$0xff]
        %v314 = vld [vmem:[%s245 + $0x70] sm:$0xff]
        %v315 = vld [vmem:[%s245 + $0x78] sm:$0xff]
        %v316 = vld [vmem:[%s254] sm:$0xff]
        %v317 = vld [vmem:[%s254 + $0x8] sm:$0xff]
        %v318 = vld [vmem:[%s254 + $0x10] sm:$0xff]
        %v319 = vld [vmem:[%s254 + $0x18] sm:$0xff]
        %v320 = vld [vmem:[%s254 + $0x20] sm:$0xff]
        %v321 = vld [vmem:[%s254 + $0x28] sm:$0xff]
        %v322 = vld [vmem:[%s254 + $0x30] sm:$0xff]
        %v323 = vld [vmem:[%s254 + $0x38] sm:$0xff]
        %v324 = vld [vmem:[%s254 + $0x40] sm:$0xff]
        %v325 = vld [vmem:[%s254 + $0x48] sm:$0xff]
        %v326 = vld [vmem:[%s254 + $0x50] sm:$0xff]
        %v327 = vld [vmem:[%s254 + $0x58] sm:$0xff]
        %v328 = vld [vmem:[%s254 + $0x60] sm:$0xff]
        %v329 = vld [vmem:[%s254 + $0x68] sm:$0xff]
        %v330 = vld [vmem:[%s254 + $0x70] sm:$0xff]
        %v331 = vld [vmem:[%s254 + $0x78] sm:$0xff]
        %v332 = vld [vmem:[%s2] sm:$0xff]
        %v333 = vld [vmem:[%s2 + $0x8] sm:$0xff]
        %v334 = vld [vmem:[%s2 + $0x10] sm:$0xff]
        %v335 = vld [vmem:[%s2 + $0x18] sm:$0xff]
        %v336 = vld [vmem:[%s2 + $0x20] sm:$0xff]
        %v337 = vld [vmem:[%s2 + $0x28] sm:$0xff]
        %v338 = vld [vmem:[%s2 + $0x30] sm:$0xff]
        %v339 = vld [vmem:[%s2 + $0x38] sm:$0xff]
        %v340 = vld [vmem:[%s2 + $0x40] sm:$0xff]
        %v341 = vld [vmem:[%s2 + $0x48] sm:$0xff]
        %v342 = vld [vmem:[%s2 + $0x50] sm:$0xff]
        %v343 = vld [vmem:[%s2 + $0x58] sm:$0xff]
        %v344 = vld [vmem:[%s2 + $0x60] sm:$0xff]
        %v345 = vld [vmem:[%s2 + $0x68] sm:$0xff]
        %v346 = vld [vmem:[%s2 + $0x70] sm:$0xff]
        %v347 = vld [vmem:[%s2 + $0x78] sm:$0xff]
        %v348 = vld [vmem:[%s3] sm:$0x1]
        %v350 = vlaneseq
        %v351 = vshrl.u32 %v350, 7
        %v352 = vsub.s32 0, %v351
        %v353 = vrot.slane %v348, %v352
        %355 = vmatprep.subr.mxu0 0.0
        %356 = vmatpush1.xpose.msra.mxu0 %v332
        %357 = vmatprep.subr.mxu0 0.0
        %358 = vmatpush1.xpose.msra.mxu0 %v333
        %359 = vmatprep.subr.mxu0 0.0
        %360 = vmatpush1.xpose.msra.mxu0 %v334
        %361 = vmatprep.subr.mxu0 0.0
        %362 = vmatpush1.xpose.msra.mxu0 %v335
        %363 = vmatprep.subr.mxu0 0.0
        %364 = vmatpush1.xpose.msra.mxu0 %v336
        %365 = vmatprep.subr.mxu0 0.0
        %366 = vmatpush1.xpose.msra.mxu0 %v337
        %367 = vmatprep.subr.mxu0 0.0
        %368 = vmatpush1.xpose.msra.mxu0 %v338
        %369 = vmatprep.subr.mxu0 0.0
        %370 = vmatpush1.xpose.msra.mxu0 %v339
        %371 = vmatprep.subr.mxu0 0.0
        %372 = vmatpush1.xpose.msra.mxu0 %v340
        %373 = vmatprep.subr.mxu0 0.0
        %374 = vmatpush1.xpose.msra.mxu0 %v341
        %375 = vmatprep.subr.mxu0 0.0
        %376 = vmatpush1.xpose.msra.mxu0 %v342
        %377 = vmatprep.subr.mxu0 0.0
        %378 = vmatpush1.xpose.msra.mxu0 %v343
        %379 = vmatprep.subr.mxu0 0.0
        %380 = vmatpush1.xpose.msra.mxu0 %v344
        %381 = vmatprep.subr.mxu0 0.0
        %382 = vmatpush1.xpose.msra.mxu0 %v345
        %383 = vmatprep.subr.mxu0 0.0
        %384 = vmatpush1.xpose.msra.mxu0 %v346
        %385 = vmatprep.subr.mxu0 0.0
        %386 = vmatpush1.xpose.msra.mxu0 %v347
        %387 = vmatprep.subr.mxu0 0.0
        %388 = vmatpush1.xpose.msra.mxu0 0.0
        %389 = vmatprep.subr.mxu0 0.0
        %390 = vmatpush1.xpose.msra.mxu0 0.0
        %391 = vmatprep.subr.mxu0 0.0
        %392 = vmatpush1.xpose.msra.mxu0 0.0
        %393 = vmatprep.subr.mxu0 0.0
        %394 = vmatpush1.xpose.msra.mxu0 0.0
        %395 = vmatprep.subr.mxu0 0.0
        %396 = vmatpush1.xpose.msra.mxu0 0.0
        %397 = vmatprep.subr.mxu0 0.0
        %398 = vmatpush1.xpose.msra.mxu0 0.0
        %399 = vmatprep.subr.mxu0 0.0
        %400 = vmatpush1.xpose.msra.mxu0 0.0
        %401 = vmatprep.subr.mxu0 0.0
        %402 = vmatpush1.xpose.msra.mxu0 0.0
        %403 = vmatprep.subr.mxu0 0.0
        %404 = vmatpush1.xpose.msra.mxu0 0.0
        %405 = vmatprep.subr.mxu0 0.0
        %406 = vmatpush1.xpose.msra.mxu0 0.0
        %407 = vmatprep.subr.mxu0 0.0
        %408 = vmatpush1.xpose.msra.mxu0 0.0
        %409 = vmatprep.subr.mxu0 0.0
        %410 = vmatpush1.xpose.msra.mxu0 0.0
        %411 = vmatprep.subr.mxu0 0.0
        %412 = vmatpush1.xpose.msra.mxu0 0.0
        %413 = vmatprep.subr.mxu0 0.0
        %414 = vmatpush1.xpose.msra.mxu0 0.0
        %415 = vmatprep.subr.mxu0 0.0
        %416 = vmatpush1.xpose.msra.mxu0 0.0
        %417 = vmatprep.subr.mxu0 0.0
        %418 = vmatpush1.xpose.msra.mxu0 0.0
        %419 = vmatprep.mubr.f32.mxu0 0.0
        %420 = vmatmul.mubr.f32.gmra.mrb[0].mxu0 %v300
        %v421 = vpop.f32.mrb[0].mxu0
        %v422 = vadd.f32 %v353, %v421
        %v423 = vpop.f32.mrb[0].mxu0
        %424 = vmatprep.mubr.f32.mxu0 0.0
        %425 = vmatmul.mubr.f32.gmra.mrb[0].mxu0 %v301
        %v426 = vpop.f32.mrb[0].mxu0
        %v427 = vadd.f32 %v353, %v426
        %v428 = vpop.f32.mrb[0].mxu0
        %429 = vmatprep.mubr.f32.mxu0 0.0
        %430 = vmatmul.mubr.f32.gmra.mrb[0].mxu0 %v302
        %v431 = vpop.f32.mrb[0].mxu0
        %v432 = vadd.f32 %v353, %v431
        %v433 = vpop.f32.mrb[0].mxu0
        %434 = vmatprep.mubr.f32.mxu0 0.0
        %435 = vmatmul.mubr.f32.gmra.mrb[0].mxu0 %v303
        %v436 = vpop.f32.mrb[0].mxu0
        %v437 = vadd.f32 %v353, %v436
        %v438 = vpop.f32.mrb[0].mxu0
        %439 = vmatprep.mubr.f32.mxu0 0.0
        %440 = vmatmul.mubr.f32.gmra.mrb[0].mxu0 %v304
        %v441 = vpop.f32.mrb[0].mxu0
        %v442 = vadd.f32 %v353, %v441
        %v443 = vpop.f32.mrb[0].mxu0
        %444 = vmatprep.mubr.f32.mxu0 0.0
        %445 = vmatmul.mubr.f32.gmra.mrb[0].mxu0 %v305
        %v446 = vpop.f32.mrb[0].mxu0
        %v447 = vadd.f32 %v353, %v446
        %v448 = vpop.f32.mrb[0].mxu0
        %449 = vmatprep.mubr.f32.mxu0 0.0
        %450 = vmatmul.mubr.f32.gmra.mrb[0].mxu0 %v306
        %v451 = vpop.f32.mrb[0].mxu0
        %v452 = vadd.f32 %v353, %v451
        %v453 = vpop.f32.mrb[0].mxu0
        %454 = vmatprep.mubr.f32.mxu0 0.0
        %455 = vmatmul.mubr.f32.gmra.mrb[0].mxu0 %v307
        %v456 = vpop.f32.mrb[0].mxu0
        %v457 = vadd.f32 %v353, %v456
        %v458 = vpop.f32.mrb[0].mxu0
        %459 = vmatprep.mubr.f32.mxu0 0.0
        %460 = vmatmul.mubr.f32.gmra.mrb[0].mxu0 %v308
        %v461 = vpop.f32.mrb[0].mxu0
        %v462 = vadd.f32 %v353, %v461
        %v463 = vpop.f32.mrb[0].mxu0
        %464 = vmatprep.mubr.f32.mxu0 0.0
        %465 = vmatmul.mubr.f32.gmra.mrb[0].mxu0 %v309
        %v466 = vpop.f32.mrb[0].mxu0
        %v467 = vadd.f32 %v353, %v466
        %v468 = vpop.f32.mrb[0].mxu0
        %469 = vmatprep.mubr.f32.mxu0 0.0
        %470 = vmatmul.mubr.f32.gmra.mrb[0].mxu0 %v310
        %v471 = vpop.f32.mrb[0].mxu0
        %v472 = vadd.f32 %v353, %v471
        %v473 = vpop.f32.mrb[0].mxu0
        %474 = vmatprep.mubr.f32.mxu0 0.0
        %475 = vmatmul.mubr.f32.gmra.mrb[0].mxu0 %v311
        %v476 = vpop.f32.mrb[0].mxu0
        %v477 = vadd.f32 %v353, %v476
        %v478 = vpop.f32.mrb[0].mxu0
        %479 = vmatprep.mubr.f32.mxu0 0.0
        %480 = vmatmul.mubr.f32.gmra.mrb[0].mxu0 %v312
        %v481 = vpop.f32.mrb[0].mxu0
        %v482 = vadd.f32 %v353, %v481
        %v483 = vpop.f32.mrb[0].mxu0
        %484 = vmatprep.mubr.f32.mxu0 0.0
        %485 = vmatmul.mubr.f32.gmra.mrb[0].mxu0 %v313
        %v486 = vpop.f32.mrb[0].mxu0
        %v487 = vadd.f32 %v353, %v486
        %v488 = vpop.f32.mrb[0].mxu0
        %489 = vmatprep.mubr.f32.mxu0 0.0
        %490 = vmatmul.mubr.f32.gmra.mrb[0].mxu0 %v314
        %v491 = vpop.f32.mrb[0].mxu0
        %v492 = vadd.f32 %v353, %v491
        %v493 = vpop.f32.mrb[0].mxu0
        %494 = vmatprep.mubr.f32.mxu0 0.0
        %495 = vmatmul.mubr.f32.gmra.mrb[0].mxu0 %v315
        %v496 = vpop.f32.mrb[0].mxu0
        %v497 = vadd.f32 %v353, %v496
        %v498 = vpop.f32.mrb[0].mxu0
        %499 = vdwg.mxu0
        %500 = vst [vmem:[%s297] sm:$0xff] %v422
        %501 = vst [vmem:[%s297 + $0x8] sm:$0xff] %v427
        %502 = vst [vmem:[%s297 + $0x10] sm:$0xff] %v432
        %503 = vst [vmem:[%s297 + $0x18] sm:$0xff] %v437
        %504 = vst [vmem:[%s297 + $0x20] sm:$0xff] %v442
        %505 = vst [vmem:[%s297 + $0x28] sm:$0xff] %v447
        %506 = vst [vmem:[%s297 + $0x30] sm:$0xff] %v452
        %507 = vst [vmem:[%s297 + $0x38] sm:$0xff] %v457
        %508 = vst [vmem:[%s297 + $0x40] sm:$0xff] %v462
        %509 = vst [vmem:[%s297 + $0x48] sm:$0xff] %v467
        %510 = vst [vmem:[%s297 + $0x50] sm:$0xff] %v472
        %511 = vst [vmem:[%s297 + $0x58] sm:$0xff] %v477
        %512 = vst [vmem:[%s297 + $0x60] sm:$0xff] %v482
        %513 = vst [vmem:[%s297 + $0x68] sm:$0xff] %v487
        %514 = vst [vmem:[%s297 + $0x70] sm:$0xff] %v492
        %515 = vst [vmem:[%s297 + $0x78] sm:$0xff] %v497
        %516 = vmatprep.subr.mxu0 0.0
        %517 = vmatpush1.msra.mxu0 %v332
        %518 = vmatprep.subr.mxu0 0.0
        %519 = vmatpush1.msra.mxu0 %v333
        %520 = vmatprep.subr.mxu0 0.0
        %521 = vmatpush1.msra.mxu0 %v334
        %522 = vmatprep.subr.mxu0 0.0
        %523 = vmatpush1.msra.mxu0 %v335
        %524 = vmatprep.subr.mxu0 0.0
        %525 = vmatpush1.msra.mxu0 %v336
        %526 = vmatprep.subr.mxu0 0.0
        %527 = vmatpush1.msra.mxu0 %v337
        %528 = vmatprep.subr.mxu0 0.0
        %529 = vmatpush1.msra.mxu0 %v338
        %530 = vmatprep.subr.mxu0 0.0
        %531 = vmatpush1.msra.mxu0 %v339
        %532 = vmatprep.subr.mxu0 0.0
        %533 = vmatpush1.msra.mxu0 %v340
        %534 = vmatprep.subr.mxu0 0.0
        %535 = vmatpush1.msra.mxu0 %v341
        %536 = vmatprep.subr.mxu0 0.0
        %537 = vmatpush1.msra.mxu0 %v342
        %538 = vmatprep.subr.mxu0 0.0
        %539 = vmatpush1.msra.mxu0 %v343
        %540 = vmatprep.subr.mxu0 0.0
        %541 = vmatpush1.msra.mxu0 %v344
        %542 = vmatprep.subr.mxu0 0.0
        %543 = vmatpush1.msra.mxu0 %v345
        %544 = vmatprep.subr.mxu0 0.0
        %545 = vmatpush1.msra.mxu0 %v346
        %546 = vmatprep.subr.mxu0 0.0
        %547 = vmatpush1.msra.mxu0 %v347
        %548 = vmatprep.subr.mxu0 0.0
        %549 = vmatpush1.msra.mxu0 0.0
        %550 = vmatprep.subr.mxu0 0.0
        %551 = vmatpush1.msra.mxu0 0.0
        %552 = vmatprep.subr.mxu0 0.0
        %553 = vmatpush1.msra.mxu0 0.0
        %554 = vmatprep.subr.mxu0 0.0
        %555 = vmatpush1.msra.mxu0 0.0
        %556 = vmatprep.subr.mxu0 0.0
        %557 = vmatpush1.msra.mxu0 0.0
        %558 = vmatprep.subr.mxu0 0.0
        %559 = vmatpush1.msra.mxu0 0.0
        %560 = vmatprep.subr.mxu0 0.0
        %561 = vmatpush1.msra.mxu0 0.0
        %562 = vmatprep.subr.mxu0 0.0
        %563 = vmatpush1.msra.mxu0 0.0
        %564 = vmatprep.subr.mxu0 0.0
        %565 = vmatpush1.msra.mxu0 0.0
        %566 = vmatprep.subr.mxu0 0.0
        %567 = vmatpush1.msra.mxu0 0.0
        %568 = vmatprep.subr.mxu0 0.0
        %569 = vmatpush1.msra.mxu0 0.0
        %570 = vmatprep.subr.mxu0 0.0
        %571 = vmatpush1.msra.mxu0 0.0
        %572 = vmatprep.subr.mxu0 0.0
        %573 = vmatpush1.msra.mxu0 0.0
        %574 = vmatprep.subr.mxu0 0.0
        %575 = vmatpush1.msra.mxu0 0.0
        %576 = vmatprep.subr.mxu0 0.0
        %577 = vmatpush1.msra.mxu0 0.0
        %578 = vmatprep.subr.mxu0 0.0
        %579 = vmatpush1.msra.mxu0 0.0
        %580 = vmatprep.mubr.f32.mxu0 0.0
        %581 = vmatmul.mubr.f32.gmra.mrb[0].mxu0 %v316
        %v582 = vpop.f32.mrb[0].mxu0
        %v583 = vadd.f32 0.0, %v582
        %v584 = vpop.f32.mrb[0].mxu0
        %585 = vmatprep.mubr.f32.mxu0 0.0
        %586 = vmatmul.mubr.f32.gmra.mrb[0].mxu0 %v317
        %v587 = vpop.f32.mrb[0].mxu0
        %v588 = vadd.f32 0.0, %v587
        %v589 = vpop.f32.mrb[0].mxu0
        %590 = vmatprep.mubr.f32.mxu0 0.0
        %591 = vmatmul.mubr.f32.gmra.mrb[0].mxu0 %v318
        %v592 = vpop.f32.mrb[0].mxu0
        %v593 = vadd.f32 0.0, %v592
        %v594 = vpop.f32.mrb[0].mxu0
        %595 = vmatprep.mubr.f32.mxu0 0.0
        %596 = vmatmul.mubr.f32.gmra.mrb[0].mxu0 %v319
        %v597 = vpop.f32.mrb[0].mxu0
        %v598 = vadd.f32 0.0, %v597
        %v599 = vpop.f32.mrb[0].mxu0
        %600 = vmatprep.mubr.f32.mxu0 0.0
        %601 = vmatmul.mubr.f32.gmra.mrb[0].mxu0 %v320
        %v602 = vpop.f32.mrb[0].mxu0
        %v603 = vadd.f32 0.0, %v602
        %v604 = vpop.f32.mrb[0].mxu0
        %605 = vmatprep.mubr.f32.mxu0 0.0
        %606 = vmatmul.mubr.f32.gmra.mrb[0].mxu0 %v321
        %v607 = vpop.f32.mrb[0].mxu0
        %v608 = vadd.f32 0.0, %v607
        %v609 = vpop.f32.mrb[0].mxu0
        %610 = vmatprep.mubr.f32.mxu0 0.0
        %611 = vmatmul.mubr.f32.gmra.mrb[0].mxu0 %v322
        %v612 = vpop.f32.mrb[0].mxu0
        %v613 = vadd.f32 0.0, %v612
        %v614 = vpop.f32.mrb[0].mxu0
        %615 = vmatprep.mubr.f32.mxu0 0.0
        %616 = vmatmul.mubr.f32.gmra.mrb[0].mxu0 %v323
        %v617 = vpop.f32.mrb[0].mxu0
        %v618 = vadd.f32 0.0, %v617
        %v619 = vpop.f32.mrb[0].mxu0
        %620 = vmatprep.mubr.f32.mxu0 0.0
        %621 = vmatmul.mubr.f32.gmra.mrb[0].mxu0 %v324
        %v622 = vpop.f32.mrb[0].mxu0
        %v623 = vadd.f32 0.0, %v622
        %v624 = vpop.f32.mrb[0].mxu0
        %625 = vmatprep.mubr.f32.mxu0 0.0
        %626 = vmatmul.mubr.f32.gmra.mrb[0].mxu0 %v325
        %v627 = vpop.f32.mrb[0].mxu0
        %v628 = vadd.f32 0.0, %v627
        %v629 = vpop.f32.mrb[0].mxu0
        %630 = vmatprep.mubr.f32.mxu0 0.0
        %631 = vmatmul.mubr.f32.gmra.mrb[0].mxu0 %v326
        %v632 = vpop.f32.mrb[0].mxu0
        %v633 = vadd.f32 0.0, %v632
        %v634 = vpop.f32.mrb[0].mxu0
        %635 = vmatprep.mubr.f32.mxu0 0.0
        %636 = vmatmul.mubr.f32.gmra.mrb[0].mxu0 %v327
        %v637 = vpop.f32.mrb[0].mxu0
        %v638 = vadd.f32 0.0, %v637
        %v639 = vpop.f32.mrb[0].mxu0
        %640 = vmatprep.mubr.f32.mxu0 0.0
        %641 = vmatmul.mubr.f32.gmra.mrb[0].mxu0 %v328
        %v642 = vpop.f32.mrb[0].mxu0
        %v643 = vadd.f32 0.0, %v642
        %v644 = vpop.f32.mrb[0].mxu0
        %645 = vmatprep.mubr.f32.mxu0 0.0
        %646 = vmatmul.mubr.f32.gmra.mrb[0].mxu0 %v329
        %v647 = vpop.f32.mrb[0].mxu0
        %v648 = vadd.f32 0.0, %v647
        %v649 = vpop.f32.mrb[0].mxu0
        %650 = vmatprep.mubr.f32.mxu0 0.0
        %651 = vmatmul.mubr.f32.gmra.mrb[0].mxu0 %v330
        %v652 = vpop.f32.mrb[0].mxu0
        %v653 = vadd.f32 0.0, %v652
        %v654 = vpop.f32.mrb[0].mxu0
        %655 = vmatprep.mubr.f32.mxu0 0.0
        %656 = vmatmul.mubr.f32.gmra.mrb[0].mxu0 %v331
        %v657 = vpop.f32.mrb[0].mxu0
        %v658 = vadd.f32 0.0, %v657
        %v659 = vpop.f32.mrb[0].mxu0
        %660 = vdwg.mxu0
        %v661 = vsub.f32 0.0, %v583
        %v662 = vsub.f32 0.0, %v588
        %v663 = vsub.f32 0.0, %v593
        %v664 = vsub.f32 0.0, %v598
        %v665 = vsub.f32 0.0, %v603
        %v666 = vsub.f32 0.0, %v608
        %v667 = vsub.f32 0.0, %v613
        %v668 = vsub.f32 0.0, %v618
        %v669 = vsub.f32 0.0, %v623
        %v670 = vsub.f32 0.0, %v628
        %v671 = vsub.f32 0.0, %v633
        %v672 = vsub.f32 0.0, %v638
        %v673 = vsub.f32 0.0, %v643
        %v674 = vsub.f32 0.0, %v648
        %v675 = vsub.f32 0.0, %v653
        %v676 = vsub.f32 0.0, %v658
        %677 = vst [vmem:[%s290] sm:$0xff] %v661
        %678 = vst [vmem:[%s290 + $0x8] sm:$0xff] %v662
        %679 = vst [vmem:[%s290 + $0x10] sm:$0xff] %v663
        %680 = vst [vmem:[%s290 + $0x18] sm:$0xff] %v664
        %681 = vst [vmem:[%s290 + $0x20] sm:$0xff] %v665
        %682 = vst [vmem:[%s290 + $0x28] sm:$0xff] %v666
        %683 = vst [vmem:[%s290 + $0x30] sm:$0xff] %v667
        %684 = vst [vmem:[%s290 + $0x38] sm:$0xff] %v668
        %685 = vst [vmem:[%s290 + $0x40] sm:$0xff] %v669
        %686 = vst [vmem:[%s290 + $0x48] sm:$0xff] %v670
        %687 = vst [vmem:[%s290 + $0x50] sm:$0xff] %v671
        %688 = vst [vmem:[%s290 + $0x58] sm:$0xff] %v672
        %689 = vst [vmem:[%s290 + $0x60] sm:$0xff] %v673
        %690 = vst [vmem:[%s290 + $0x68] sm:$0xff] %v674
        %691 = vst [vmem:[%s290 + $0x70] sm:$0xff] %v675
        %692 = vst [vmem:[%s290 + $0x78] sm:$0xff] %v676
        %s693 = smul.u32 16, %s26
        %p694 = scmp.lt.s32.totalorder %s693, 31
        %s695 = scalar_select %p694, %s693, 31
        %s696 = smul.addr %s695, 8
        %s697 = scalar_lea.vmem %s4, %s696
        %s698 = sand.u32 %s154, 1
        %s699 = scalar_lea.sflag [#allocation4], %s698
        %s700 = sand.u32 %s154, 1
        %s701 = smul.addr %s700, 128
        %s702 = scalar_lea.vmem [#allocation7], %s701
        // Predicated region
        $region45: #{aug_reverse_pallas.1} parent=35 // pred_check
          %p703 = pneg %p138
        $region46: #{aug_reverse_pallas.1} parent=35 // pred_check_branch
          %705 = sbr.rel (%p703) target = $region48
        $region47: #{aug_reverse_pallas.1} parent=35 // pred_region
          %s706 = smul.u32 16, %s26
        $region48: #{aug_reverse_pallas.1} parent=35 // pred_fallthru
          _
        // Predicated region
        $region49: #{aug_reverse_pallas.1} parent=35 // pred_check
          %p707 = pneg %p164
        $region50: #{aug_reverse_pallas.1} parent=35 // pred_check_branch
          %709 = sbr.rel (%p707) target = $region52
        $region51: #{aug_reverse_pallas.1} parent=35 // pred_region
          %s710 = smul.u32 16, %s26
          %s712 = ssub.s32 2048, 2048
          %713 = vsyncadd %s699, %s712
          %s714 = smul.addr %s710, 128
          %s715 = scalar_lea.hbm %s5, %s714
          %s716 = sshll.u32 %s702, 4
          %s717 = int_to_ptr.vmem [resolvable:$true] %s716
          %722 = dma.vmem_to_hbm [thread:$0]  %s717, 2048, %s715, %s699, 128, 128, 8
        $region52: #{aug_reverse_pallas.1} parent=35 // pred_fallthru
          _
      $region36: #{aug_reverse_pallas.1} parent=5 // pred_fallthru
        _
      %p723 = scmp.le.s32.totalorder 2, %s21
      // Predicated region
      $region53: #{aug_reverse_pallas.1} parent=5 // pred_check
        %p724 = pneg %p723
      $region54: #{aug_reverse_pallas.1} parent=5 // pred_check_branch
        %726 = sbr.rel (%p724) target = $region56
      $region55: #{aug_reverse_pallas.1} parent=5 // pred_region
        %s727 = ssub.s32 %s21, 2
        // Predicated region
        $region57: #{aug_reverse_pallas.1} parent=55 // pred_check
          %p728 = pneg %p144
        $region58: #{aug_reverse_pallas.1} parent=55 // pred_check_branch
          %730 = sbr.rel (%p728) target = $region60
        $region59: #{aug_reverse_pallas.1} parent=55 // pred_region
          %s731 = smul.u32 16, %s27
          %p732 = scmp.lt.s32.totalorder %s731, 31
          %s733 = scalar_select %p732, %s731, 31
          %s734 = smul.addr %s733, 8
          %s735 = scalar_lea.vmem %s4, %s734
        $region60: #{aug_reverse_pallas.1} parent=55 // pred_fallthru
          _
        // Predicated region
        $region61: #{aug_reverse_pallas.1} parent=55 // pred_check
          %p736 = pneg %p170
        $region62: #{aug_reverse_pallas.1} parent=55 // pred_check_branch
          %738 = sbr.rel (%p736) target = $region64
        $region63: #{aug_reverse_pallas.1} parent=55 // pred_region
          %s739 = sand.u32 %s155, 1
          %s740 = scalar_lea.sflag [#allocation4], %s739
          %s741 = sand.u32 %s155, 1
          %s742 = smul.addr %s741, 128
          %s743 = scalar_lea.vmem [#allocation7], %s742
          %744 = dma.done %s740, 2048
        $region64: #{aug_reverse_pallas.1} parent=55 // pred_fallthru
          _
      $region56: #{aug_reverse_pallas.1} parent=5 // pred_fallthru
        _
    $region6: #{aug_reverse_pallas.1} parent=1 // loop_footer
      %s25 = sadd.s32 1, %s21
    $region7: #{aug_reverse_pallas.1} parent=1 // loop_footer_branch
      %20 = sbr.rel target = $region3
    $region8: #{aug_reverse_pallas.1} parent=1 // loop_exit
      _
    %745 = vsyncpa [#allocation3], 1
    %s746 = scalar_lea.sflag [#allocation3], 1
    %747 = vsyncpa %s746, 1
    %748 = vsyncpa [#allocation6], 1
    %s749 = scalar_lea.sflag [#allocation6], 1
    %750 = vsyncpa %s749, 1
    %751 = vsyncpa [#allocation4], 1
    %s752 = scalar_lea.sflag [#allocation4], 1
    %753 = vsyncpa %s752, 1

</llo_original>
